<compile_context>
chip_gen: v7x
topology: tpu7x:2x2x1
jax: 0.10.0
libtpu: 0.0.40
codegen_flags: <defaults>
</compile_context>

<pallas_src>
import functools

import jax
import jax.numpy as jnp
from jax.experimental import pallas as pl
from jax.experimental.pallas import tpu as pltpu

LANES = 128
SUBLANES = 8
GROUP_ROWS = 64          # rows per inner-loop step; multiple of 32 (f32/bf16/int8 safe)


def _round_up(x, m):
    return ((x + m - 1) // m) * m


def _cdiv(a, b):
    return (a + b - 1) // b


def _detect_num_tensorcores():
    """2 on dual-TensorCore chips (v7x); 1 on v5e/v6e or if detection fails."""
    try:
        kind = jax.devices()[0].device_kind.lower()
        if "v7" in kind or "7x" in kind:
            return 2
    except Exception:
        pass
    return 1


def _focal_tversky_sums_kernel(x_ref, t_ref, o_ref, *, blocks_per_shard,
                               valid_rows, need_mask):
    """Accumulate vreg-shaped partial sums of (p*t, p, t) for one shard.

    x_ref, t_ref: (tm, 128) input tiles in their NATIVE dtype (tm % GROUP_ROWS == 0).
    o_ref:        (1, 24, 128) f32 output block, resident across the reduction axis:
                  rows [0:8)   partial sum of p*t
                  rows [8:16)  partial sum of p
                  rows [16:24) partial sum of t
    The cross-lane reduction and the Tversky/focal formula happen in the JAX wrapper.
    """
    s = pl.program_id(0)
    k = pl.program_id(1)

    @pl.when(k == 0)
    def _():
        o_ref[...] = jnp.zeros_like(o_ref)

    tm = x_ref.shape[0]
    num_groups = tm // GROUP_ROWS
    row0 = (s * blocks_per_shard + k) * tm            # global start row (unclamped)

    if need_mask:
        base_iota = jax.lax.broadcasted_iota(jnp.int32, (GROUP_ROWS, LANES), 0)

    def body(g, carry):
        pt_acc, p_acc, t_acc = carry
        off = pl.multiple_of(g * GROUP_ROWS, GROUP_ROWS)
        x = x_ref[pl.ds(off, GROUP_ROWS), :].astype(jnp.float32)
        t = t_ref[pl.ds(off, GROUP_ROWS), :].astype(jnp.float32)
        # sigmoid(x) == 0.5 * (tanh(x/2) + 1): a single EUP op per vreg, full precision.
        p = 0.5 * (jnp.tanh(0.5 * x) + 1.0)
        if need_mask:
            valid = (row0 + off + base_iota) < valid_rows
            p = jnp.where(valid, p, 0.0)
            t = jnp.where(valid, t, 0.0)
        gsub = GROUP_ROWS // SUBLANES
        pt_acc = pt_acc + jnp.sum((p * t).reshape(gsub, SUBLANES, LANES), axis=0)
        p_acc = p_acc + jnp.sum(p.reshape(gsub, SUBLANES, LANES), axis=0)
        t_acc = t_acc + jnp.sum(t.reshape(gsub, SUBLANES, LANES), axis=0)
        return pt_acc, p_acc, t_acc

    zero = jnp.zeros((SUBLANES, LANES), jnp.float32)
    pt, ps, ts = jax.lax.fori_loop(0, num_groups, body, (zero, zero, zero))

    o_ref[0, 0:SUBLANES, :] += pt
    o_ref[0, SUBLANES:2 * SUBLANES, :] += ps
    o_ref[0, 2 * SUBLANES:3 * SUBLANES, :] += ts


def _partial_sums(x2, t2, tile_rows, num_shards):
    """Run the streaming-sum kernel on a lane-dense (rows, 128) view."""
    main_rows = x2.shape[0]

    tm = min(_round_up(tile_rows, GROUP_ROWS), _round_up(main_rows, GROUP_ROWS))
    total_blocks = _cdiv(main_rows, tm)

    if num_shards is None:
        num_shards = _detect_num_tensorcores()
    num_shards = max(1, min(num_shards, total_blocks))
    blocks_per_shard = _cdiv(total_blocks, num_shards)

    need_mask = (main_rows % tm != 0) or (num_shards * blocks_per_shard != total_blocks)

    if num_shards * blocks_per_shard == total_blocks:
        def in_map(s, k):
            return (s * blocks_per_shard + k, 0)
    else:
        # Clamp so DMAs stay in-bounds; the in-kernel row mask zeroes any overrun tile.
        def in_map(s, k):
            return (jnp.minimum(s * blocks_per_shard + k, total_blocks - 1), 0)

    kernel = functools.partial(
        _focal_tversky_sums_kernel,
        blocks_per_shard=blocks_per_shard,
        valid_rows=main_rows,
        need_mask=need_mask)

    def call(dims):
        return pl.pallas_call(
            kernel,
            out_shape=jax.ShapeDtypeStruct(
                (num_shards, 3 * SUBLANES, LANES), jnp.float32),
            grid_spec=pltpu.PrefetchScalarGridSpec(
                num_scalar_prefetch=0,
                grid=(num_shards, blocks_per_shard),
                in_specs=[
                    pl.BlockSpec((tm, LANES), in_map),
                    pl.BlockSpec((tm, LANES), in_map),
                ],
                out_specs=pl.BlockSpec(
                    (1, 3 * SUBLANES, LANES), lambda s, k: (s, 0, 0)),
            ),
            compiler_params=pltpu.CompilerParams(dimension_semantics=dims),
        )(x2, t2)

    if num_shards > 1:
        # Genuinely split the shard axis across TensorCores on v7x; plain "parallel"
        # does not reliably change codegen. Fall back gracefully if unsupported.
        try:
            return call((pltpu.CORE_PARALLEL, pltpu.ARBITRARY))
        except Exception:
            return call(("parallel", "arbitrary"))
    return call(("arbitrary", "arbitrary"))


def focal_tversky_loss(inputs, targets, smooth=1.0, alpha=0.5, beta=0.5,
                       gamma=1.0, *, tile_rows=2048, num_shards=None):
    """FocalTverskyLoss.forward(inputs, targets, smooth, alpha, beta, gamma)."""
    assert inputs.shape == targets.shape
    total_n = int(inputs.size)

    x_flat = inputs.reshape(-1)          # native dtype; no wrapper upcast / pad copy
    t_flat = targets.reshape(-1)

    main_rows = total_n // LANES
    main_n = main_rows * LANES

    tp = jnp.float32(0.0)
    sum_p = jnp.float32(0.0)
    sum_t = jnp.float32(0.0)

    if main_rows > 0:
        if main_n == total_n:
            x2 = x_flat.reshape(main_rows, LANES)     # free, lane-dense view
            t2 = t_flat.reshape(main_rows, LANES)
        else:
            x2 = x_flat[:main_n].reshape(main_rows, LANES)
            t2 = t_flat[:main_n].reshape(main_rows, LANES)
        partials = _partial_sums(x2, t2, tile_rows, num_shards)
        sums = jnp.sum(partials.reshape(-1, 3, SUBLANES, LANES), axis=(0, 2, 3))
        tp, sum_p, sum_t = sums[0], sums[1], sums[2]

    if main_n < total_n:
        # <128-element ragged remainder handled in plain JAX.
        x_tail = x_flat[main_n:].astype(jnp.float32)
        t_tail = t_flat[main_n:].astype(jnp.float32)
        p_tail = jax.nn.sigmoid(x_tail)
        tp = tp + jnp.sum(p_tail * t_tail)
        sum_p = sum_p + jnp.sum(p_tail)
        sum_t = sum_t + jnp.sum(t_tail)

    fp = sum_p - tp           # sum((1 - t) * p)
    fn = sum_t - tp           # sum(t * (1 - p))
    tversky = (tp + smooth) / (tp + alpha * fp + beta * fn + smooth)
    # Clamp guards against f32 rounding nudging tversky a hair above 1 (NaN for
    # non-integer gamma otherwise).
    return jnp.maximum(1.0 - tversky, 0.0) ** gamma


def focal_tversky_loss_ref(inputs, targets, smooth=1.0, alpha=0.5, beta=0.5,
                           gamma=1.0):
    p = jax.nn.sigmoid(inputs.astype(jnp.float32)).reshape(-1)
    t = targets.astype(jnp.float32).reshape(-1)
    tp = jnp.sum(p * t)
    fp = jnp.sum((1.0 - t) * p)
    fn = jnp.sum(t * (1.0 - p))
    tversky = (tp + smooth) / (tp + alpha * fp + beta * fn + smooth)
    return (1.0 - tversky) ** gamma


if __name__ == "__main__":
    key = jax.random.PRNGKey(0)
    k1, k2, k3, k4 = jax.random.split(key, 4)

    # NCHW logits and binary targets, as the segmentation module implies.
    x = jax.random.normal(k1, (2, 4, 16, 16), dtype=jnp.float32)
    t = (jax.random.uniform(k2, (2, 4, 16, 16)) > 0.5).astype(jnp.float32)

    loss = jax.block_until_ready(focal_tversky_loss(x, t, smooth=1.0))
    ref = jax.block_until_ready(focal_tversky_loss_ref(x, t, smooth=1.0))
    assert jnp.allclose(loss, ref, rtol=1e-5, atol=1e-5), (loss, ref)

    # Ragged shape (size not a multiple of 128): exercises the in-kernel row mask
    # plus the plain-JAX tail path.
    xr = jax.random.normal(k3, (2, 3, 15, 17), dtype=jnp.float32)
    tr = (jax.random.uniform(k4, (2, 3, 15, 17)) > 0.5).astype(jnp.float32)
    loss_r = jax.block_until_ready(
        focal_tversky_loss(xr, tr, smooth=1.0, alpha=0.7, beta=0.3, gamma=2.0))
    ref_r = jax.block_until_ready(
        focal_tversky_loss_ref(xr, tr, smooth=1.0, alpha=0.7, beta=0.3, gamma=2.0))
    assert jnp.allclose(loss_r, ref_r, rtol=1e-5, atol=1e-5), (loss_r, ref_r)

    # bf16 logits path: no wrapper upcast copy; kernel upcasts per tile.
    xb = x.astype(jnp.bfloat16)
    loss_b = jax.block_until_ready(focal_tversky_loss(xb, t, smooth=1.0))
    ref_b = jax.block_until_ready(focal_tversky_loss_ref(xb, t, smooth=1.0))
    assert jnp.allclose(loss_b, ref_b, rtol=1e-4, atol=1e-4), (loss_b, ref_b)

    print("KERNEL_OK")
</pallas_src>

<mosaic_0001>
module attributes {stable_mosaic.version = 11 : i64} {
  func.func @_focal_tversky_sums_kernel(%arg0: i32, %arg1: i32, %arg2: memref<64x128xf32, #tpu.memory_space<vmem>>, %arg3: memref<64x128xf32, #tpu.memory_space<vmem>>, %arg4: memref<1x24x128xf32, #tpu.memory_space<vmem>>) attributes {dimension_semantics = [#tpu.dimension_semantics<arbitrary>, #tpu.dimension_semantics<arbitrary>], iteration_bounds = array<i64: 1, 1>, scalar_prefetch = 0 : i64, scratch_operands = 0 : i64, tpu.core_type = #tpu.core_type<tc>, window_params = [{transform_indices = @transform_0, window_bounds = array<i64: 64, 128>}, {transform_indices = @transform_1, window_bounds = array<i64: 64, 128>}, {transform_indices = @transform_2, window_bounds = array<i64: 1, 24, 128>}]} {
    %c0_i32 = arith.constant 0 : i32
    %0 = arith.cmpi eq, %arg1, %c0_i32 : i32
    %1 = arith.extui %0 : i1 to i32
    %c0_i32_0 = arith.constant 0 : i32
    %2 = arith.cmpi ne, %1, %c0_i32_0 : i32
    scf.if %2 {
      %cst_29 = arith.constant 0.000000e+00 : f32
      %58 = vector.broadcast %cst_29 : f32 to vector<1x24x128xf32>
      %c0_30 = arith.constant 0 : index
      %c0_31 = arith.constant 0 : index
      %c0_32 = arith.constant 0 : index
      %59 = vector.load %arg4[%c0_30, %c0_31, %c0_32] : memref<1x24x128xf32, #tpu.memory_space<vmem>>, vector<1x24x128xf32>
      tpu.vector_store %arg4[%c0_30, %c0_31, %c0_32], %58 {strides = array<i32>} : memref<1x24x128xf32, #tpu.memory_space<vmem>>, vector<1x24x128xf32>,
    } else {
    }
    %c1_i32 = arith.constant 1 : i32
    %3 = arith.muli %arg0, %c1_i32 : i32
    %4 = arith.addi %3, %arg1 : i32
    %c64_i32 = arith.constant 64 : i32
    %5 = arith.muli %4, %c64_i32 : i32
    %6 = tpu.iota {dimensions = array<i32: 0>} : vector<64x128xi32>
    %cst = arith.constant 0.000000e+00 : f32
    %7 = vector.broadcast %cst : f32 to vector<8x128xf32>
    %c0_i32_1 = arith.constant 0 : i32
    %c64_i32_2 = arith.constant 64 : i32
    %8 = arith.muli %c0_i32_1, %c64_i32_2 : i32
    %9 = tpu.assume_multiple %8, 64 : i32
    %10 = arith.index_cast %9 : i32 to index
    %c0 = arith.constant 0 : index
    %11 = vector.load %arg2[%10, %c0] : memref<64x128xf32, #tpu.memory_space<vmem>>, vector<64x128xf32>
    %12 = arith.index_cast %9 : i32 to index
    %c0_3 = arith.constant 0 : index
    %13 = vector.load %arg3[%12, %c0_3] : memref<64x128xf32, #tpu.memory_space<vmem>>, vector<64x128xf32>
    %cst_4 = arith.constant 5.000000e-01 : f32
    %14 = vector.broadcast %cst_4 : f32 to vector<64x128xf32>
    %15 = arith.mulf %14, %11 : vector<64x128xf32>
    %16 = math.tanh %15 : vector<64x128xf32>
    %cst_5 = arith.constant 1.000000e+00 : f32
    %17 = vector.broadcast %cst_5 : f32 to vector<64x128xf32>
    %18 = arith.addf %16, %17 : vector<64x128xf32>
    %cst_6 = arith.constant 5.000000e-01 : f32
    %19 = vector.broadcast %cst_6 : f32 to vector<64x128xf32>
    %20 = arith.mulf %19, %18 : vector<64x128xf32>
    %21 = arith.addi %5, %9 : i32
    %22 = vector.broadcast %21 : i32 to vector<64x128xi32>
    %23 = arith.addi %22, %6 : vector<64x128xi32>
    %c16_i32 = arith.constant 16 : i32
    %24 = vector.broadcast %c16_i32 : i32 to vector<64x128xi32>
    %25 = arith.cmpi slt, %23, %24 : vector<64x128xi32>
    %cst_7 = arith.constant 0.000000e+00 : f32
    %26 = vector.broadcast %cst_7 : f32 to vector<64x128xf32>
    %27 = arith.select %25, %20, %26 : vector<64x128xi1>, vector<64x128xf32>
    %cst_8 = arith.constant 0.000000e+00 : f32
    %28 = vector.broadcast %cst_8 : f32 to vector<64x128xf32>
    %29 = arith.select %25, %13, %28 : vector<64x128xi1>, vector<64x128xf32>
    %30 = arith.mulf %27, %29 : vector<64x128xf32>
    %31 = vector.shape_cast %30 : vector<64x128xf32> to vector<8x8x128xf32>
    %cst_9 = arith.constant dense<0.000000e+00> : vector<8x128xf32>
    %32 = vector.multi_reduction <add>, %31, %cst_9 [0] : vector<8x8x128xf32> to vector<8x128xf32>
    %33 = arith.addf %7, %32 : vector<8x128xf32>
    %34 = vector.shape_cast %27 : vector<64x128xf32> to vector<8x8x128xf32>
    %cst_10 = arith.constant dense<0.000000e+00> : vector<8x128xf32>
    %35 = vector.multi_reduction <add>, %34, %cst_10 [0] : vector<8x8x128xf32> to vector<8x128xf32>
    %36 = arith.addf %7, %35 : vector<8x128xf32>
    %37 = vector.shape_cast %29 : vector<64x128xf32> to vector<8x8x128xf32>
    %cst_11 = arith.constant dense<0.000000e+00> : vector<8x128xf32>
    %38 = vector.multi_reduction <add>, %37, %cst_11 [0] : vector<8x8x128xf32> to vector<8x128xf32>
    %39 = arith.addf %7, %38 : vector<8x128xf32>
    %c1_i32_12 = arith.constant 1 : i32
    %c0_13 = arith.constant 0 : index
    %c0_14 = arith.constant 0 : index
    %c0_15 = arith.constant 0 : index
    %40 = vector.load %arg4[%c0_13, %c0_14, %c0_15] : memref<1x24x128xf32, #tpu.memory_space<vmem>>, vector<1x8x128xf32>
    %41 = vector.shape_cast %40 : vector<1x8x128xf32> to vector<8x128xf32>
    %42 = arith.addf %41, %33 : vector<8x128xf32>
    %c0_16 = arith.constant 0 : index
    %c0_17 = arith.constant 0 : index
    %c0_18 = arith.constant 0 : index
    %43 = vector.load %arg4[%c0_16, %c0_17, %c0_18] : memref<1x24x128xf32, #tpu.memory_space<vmem>>, vector<1x8x128xf32>
    %44 = vector.shape_cast %43 : vector<1x8x128xf32> to vector<8x128xf32>
    %45 = vector.shape_cast %42 : vector<8x128xf32> to vector<1x8x128xf32>
    tpu.vector_store %arg4[%c0_16, %c0_17, %c0_18], %45 {strides = array<i32>} : memref<1x24x128xf32, #tpu.memory_space<vmem>>, vector<1x8x128xf32>,
    %c0_19 = arith.constant 0 : index
    %c8 = arith.constant 8 : index
    %c0_20 = arith.constant 0 : index
    %46 = vector.load %arg4[%c0_19, %c8, %c0_20] : memref<1x24x128xf32, #tpu.memory_space<vmem>>, vector<1x8x128xf32>
    %47 = vector.shape_cast %46 : vector<1x8x128xf32> to vector<8x128xf32>
    %48 = arith.addf %47, %36 : vector<8x128xf32>
    %c0_21 = arith.constant 0 : index
    %c8_22 = arith.constant 8 : index
    %c0_23 = arith.constant 0 : index
    %49 = vector.load %arg4[%c0_21, %c8_22, %c0_23] : memref<1x24x128xf32, #tpu.memory_space<vmem>>, vector<1x8x128xf32>
    %50 = vector.shape_cast %49 : vector<1x8x128xf32> to vector<8x128xf32>
    %51 = vector.shape_cast %48 : vector<8x128xf32> to vector<1x8x128xf32>
    tpu.vector_store %arg4[%c0_21, %c8_22, %c0_23], %51 {strides = array<i32>} : memref<1x24x128xf32, #tpu.memory_space<vmem>>, vector<1x8x128xf32>,
    %c0_24 = arith.constant 0 : index
    %c16 = arith.constant 16 : index
    %c0_25 = arith.constant 0 : index
    %52 = vector.load %arg4[%c0_24, %c16, %c0_25] : memref<1x24x128xf32, #tpu.memory_space<vmem>>, vector<1x8x128xf32>
    %53 = vector.shape_cast %52 : vector<1x8x128xf32> to vector<8x128xf32>
    %54 = arith.addf %53, %39 : vector<8x128xf32>
    %c0_26 = arith.constant 0 : index
    %c16_27 = arith.constant 16 : index
    %c0_28 = arith.constant 0 : index
    %55 = vector.load %arg4[%c0_26, %c16_27, %c0_28] : memref<1x24x128xf32, #tpu.memory_space<vmem>>, vector<1x8x128xf32>
    %56 = vector.shape_cast %55 : vector<1x8x128xf32> to vector<8x128xf32>
    %57 = vector.shape_cast %54 : vector<8x128xf32> to vector<1x8x128xf32>
    tpu.vector_store %arg4[%c0_26, %c16_27, %c0_28], %57 {strides = array<i32>} : memref<1x24x128xf32, #tpu.memory_space<vmem>>, vector<1x8x128xf32>,
    return
  }
  func.func @transform_0(%arg0: i32, %arg1: i32) -> (i32, i32) {
    %c1_i32 = arith.constant 1 : i32
    %0 = arith.muli %arg0, %c1_i32 : i32
    %1 = arith.addi %0, %arg1 : i32
    %c0_i32 = arith.constant 0 : i32
    %c0_i32_0 = arith.constant 0 : i32
    return %1, %c0_i32 : i32, i32
  }
  func.func @transform_1(%arg0: i32, %arg1: i32) -> (i32, i32) {
    %c1_i32 = arith.constant 1 : i32
    %0 = arith.muli %arg0, %c1_i32 : i32
    %1 = arith.addi %0, %arg1 : i32
    %c0_i32 = arith.constant 0 : i32
    %c0_i32_0 = arith.constant 0 : i32
    return %1, %c0_i32 : i32, i32
  }
  func.func @transform_2(%arg0: i32, %arg1: i32) -> (i32, i32, i32) {
    %c0_i32 = arith.constant 0 : i32
    %c0_i32_0 = arith.constant 0 : i32
    %c0_i32_1 = arith.constant 0 : i32
    return %arg0, %c0_i32, %c0_i32_0 : i32, i32, i32
  }
}

</mosaic_0001>

<llo_original>
// kernel: tpu_custom_call.1
$region0: #{tpu_custom_call.1}
  #allocation0 [shape = 'u32[]', space=smem, size = 0x4, offset = 0x4, fixed_abs, tag = 'smem constant byte address 0x4 - core index']
  #allocation1 [shape = 'u32[144,128]{1,0:T(1,128)}', space=vmem, size = 0x12000, scoped, tag = 'internal scratch']
  %s0 = inlined_call_operand.hbm [shape: f32[16,128], index: 0, kind: input, shape index: {}]
  %s1 = inlined_call_operand.hbm [shape: f32[16,128], index: 1, kind: input, shape index: {}]
  %s2 = inlined_call_operand.hbm [shape: f32[1,24,128], index: 2, kind: output, shape index: {}]
  %s3 = sld [smem:[#allocation0]]
  $region30: #{tpu_custom_call.1} parent=0
    _
  %s5 = ssub.s32 1, %s3
  %s6 = scalar_select 0, %s5, %s3
  $region1: #{tpu_custom_call.1} parent=0
    #allocation2 [shape = 'u8[32768]{0}', space=vmem, size = 0x8000, scoped, tag = 'input window, operand 0, single buffered']
    #allocation3 [shape = 's32[1]{0}', space=sflag, size = 0x4, scoped, tag = 'scoped memory for tpu_custom_call.1']
    #allocation4 [shape = 's32[1]{0}', space=sflag, size = 0x4, scoped, tag = 'scoped memory for tpu_custom_call.1']
    #allocation5 [shape = 'u8[32768]{0}', space=vmem, size = 0x8000, scoped, tag = 'input window, operand 1, single buffered']
    #allocation6 [shape = 's32[1]{0}', space=sflag, size = 0x4, scoped, tag = 'scoped memory for tpu_custom_call.1']
    #allocation7 [shape = 'u8[12288]{0}', space=vmem, size = 0x3000, scoped, tag = 'output window, operand 0, single buffered']
    %7 = vsyncpa [#allocation3], 0
    %8 = vsyncpa [#allocation6], 0
    %9 = vsyncpa [#allocation4], 0
    // Predicated region
    $region2: #{tpu_custom_call.1} parent=1 // pred_check
      _
    $region3: #{tpu_custom_call.1} parent=1 // pred_check_branch
      %11 = sbr.rel (0) target = $region5
    $region4: #{tpu_custom_call.1} parent=1 // pred_region
      %s12 = sadd.s32 0, 0
      %s13 = smul.u32 8, %s12
      %s14 = ssub.s32 2, %s13
      %s15 = smul.u32 128, %s14
      %s17 = ssub.s32 1024, %s15
      %18 = vsyncadd [#allocation3], %s17
      %p19 = scmp.ne.s32.totalorder 0, %s15
      %s20 = smul.addr %s13, 128
      %s21 = scalar_lea.hbm %s0, %s20
      %s22 = smul.u32 8, %s14
      %s23 = sshll.u32 [#allocation2], 4
      %s24 = int_to_ptr.vmem [resolvable:$true] %s23
      %s25 = sshll.u32 %s22, 4
      %29 = dma.hbm_to_vmem [thread:$0]  (%p19), %s21, %s25, %s24, [#allocation3], 128, 128, 8
    $region5: #{tpu_custom_call.1} parent=1 // pred_fallthru
      _
    // Predicated region
    $region6: #{tpu_custom_call.1} parent=1 // pred_check
      _
    $region7: #{tpu_custom_call.1} parent=1 // pred_check_branch
      %31 = sbr.rel (0) target = $region9
    $region8: #{tpu_custom_call.1} parent=1 // pred_region
      %s32 = sadd.s32 0, 0
      %s33 = smul.u32 8, %s32
      %s34 = ssub.s32 2, %s33
      %s35 = smul.u32 128, %s34
      %s37 = ssub.s32 1024, %s35
      %38 = vsyncadd [#allocation6], %s37
      %p39 = scmp.ne.s32.totalorder 0, %s35
      %s40 = smul.addr %s33, 128
      %s41 = scalar_lea.hbm %s1, %s40
      %s42 = smul.u32 8, %s34
      %s43 = sshll.u32 [#allocation5], 4
      %s44 = int_to_ptr.vmem [resolvable:$true] %s43
      %s45 = sshll.u32 %s42, 4
      %49 = dma.hbm_to_vmem [thread:$0]  (%p39), %s41, %s45, %s44, [#allocation6], 128, 128, 8
    $region9: #{tpu_custom_call.1} parent=1 // pred_fallthru
      _
    // Predicated region
    $region10: #{tpu_custom_call.1} parent=1 // pred_check
      _
    $region11: #{tpu_custom_call.1} parent=1 // pred_check_branch
      %51 = sbr.rel (0) target = $region13
    $region12: #{tpu_custom_call.1} parent=1 // pred_region
      %52 = dma.done [#allocation3], 1024
    $region13: #{tpu_custom_call.1} parent=1 // pred_fallthru
      _
    // Predicated region
    $region14: #{tpu_custom_call.1} parent=1 // pred_check
      _
    $region15: #{tpu_custom_call.1} parent=1 // pred_check_branch
      %54 = sbr.rel (0) target = $region17
    $region16: #{tpu_custom_call.1} parent=1 // pred_region
      %55 = dma.done [#allocation6], 1024
    $region17: #{tpu_custom_call.1} parent=1 // pred_fallthru
      _
    %s56 = sadd.s32 0, 0
    %s57 = smul.u32 8, %s56
    %s58 = ssub.s32 2, %s57
    %s59 = smul.u32 128, %s58
    %s60 = sadd.s32 0, 0
    %s61 = smul.u32 8, %s60
    %s62 = ssub.s32 2, %s61
    %s63 = smul.u32 128, %s62
    %p64 = scmp.eq.s32.totalorder 0, 0
    // Predicated region
    $region18: #{tpu_custom_call.1} parent=1 // pred_check
      %p65 = pneg %p64
    $region19: #{tpu_custom_call.1} parent=1 // pred_check_branch
      %67 = sbr.rel (%p65) target = $region21
    $region20: #{tpu_custom_call.1} parent=1 // pred_region
      %68 = vst [vmem:[#allocation7] sm:$0xff] 0.0
      %69 = vst [vmem:[#allocation7 + $0x8] sm:$0xff] 0.0
      %70 = vst [vmem:[#allocation7 + $0x10] sm:$0xff] 0.0
    $region21: #{tpu_custom_call.1} parent=1 // pred_fallthru
      _
    %s71 = sadd.s32 0, 0
    %s72 = smul.u32 %s71, 64
    %v73 = vlaneseq
    %v74 = vshrl.u32 %v73, 7
    %v75 = vadd.s32 %v74, 8
    %v76 = vadd.s32 %v74, 16
    %v77 = vadd.s32 %v74, 24
    %v78 = vadd.s32 %v74, 32
    %v79 = vadd.s32 %v74, 40
    %v80 = vadd.s32 %v74, 48
    %v81 = vadd.s32 %v74, 56
    %v82 = vld [vmem:[#allocation2] sm:$0xff]
    %v83 = vld [vmem:[#allocation2 + $0x8] sm:$0xff]
    %v84 = vld [vmem:[#allocation2 + $0x10] sm:$0xff]
    %v85 = vld [vmem:[#allocation2 + $0x18] sm:$0xff]
    %v86 = vld [vmem:[#allocation2 + $0x20] sm:$0xff]
    %v87 = vld [vmem:[#allocation2 + $0x28] sm:$0xff]
    %v88 = vld [vmem:[#allocation2 + $0x30] sm:$0xff]
    %v89 = vld [vmem:[#allocation2 + $0x38] sm:$0xff]
    %v90 = vld [vmem:[#allocation5] sm:$0xff]
    %v91 = vld [vmem:[#allocation5 + $0x8] sm:$0xff]
    %v92 = vld [vmem:[#allocation5 + $0x10] sm:$0xff]
    %v93 = vld [vmem:[#allocation5 + $0x18] sm:$0xff]
    %v94 = vld [vmem:[#allocation5 + $0x20] sm:$0xff]
    %v95 = vld [vmem:[#allocation5 + $0x28] sm:$0xff]
    %v96 = vld [vmem:[#allocation5 + $0x30] sm:$0xff]
    %v97 = vld [vmem:[#allocation5 + $0x38] sm:$0xff]
    %v98 = vmul.f32 %v82, 0.5
    %v99 = vmul.f32 %v83, 0.5
    %v100 = vmul.f32 %v84, 0.5
    %v101 = vmul.f32 %v85, 0.5
    %v102 = vmul.f32 %v86, 0.5
    %v103 = vmul.f32 %v87, 0.5
    %v104 = vmul.f32 %v88, 0.5
    %v105 = vmul.f32 %v89, 0.5
    %v106 = vtanh.pop %v98
    %v107 = vtanh.pop %v99
    %v108 = vtanh.pop %v100
    %v109 = vtanh.pop %v101
    %v110 = vtanh.pop %v102
    %v111 = vtanh.pop %v103
    %v112 = vtanh.pop %v104
    %v113 = vtanh.pop %v105
    %v114 = vadd.f32 %v106, 1.0
    %v115 = vadd.f32 %v107, 1.0
    %v116 = vadd.f32 %v108, 1.0
    %v117 = vadd.f32 %v109, 1.0
    %v118 = vadd.f32 %v110, 1.0
    %v119 = vadd.f32 %v111, 1.0
    %v120 = vadd.f32 %v112, 1.0
    %v121 = vadd.f32 %v113, 1.0
    %v122 = vmul.f32 %v114, 0.5
    %v123 = vmul.f32 %v115, 0.5
    %v124 = vmul.f32 %v116, 0.5
    %v125 = vmul.f32 %v117, 0.5
    %v126 = vmul.f32 %v118, 0.5
    %v127 = vmul.f32 %v119, 0.5
    %v128 = vmul.f32 %v120, 0.5
    %v129 = vmul.f32 %v121, 0.5
    %s130 = sadd.s32 %s72, 0
    %v131 = vstv %s130
    %v132 = vadd.s32 %v131, %v74
    %v133 = vadd.s32 %v131, %v75
    %v134 = vadd.s32 %v131, %v76
    %v135 = vadd.s32 %v131, %v77
    %v136 = vadd.s32 %v131, %v78
    %v137 = vadd.s32 %v131, %v79
    %v138 = vadd.s32 %v131, %v80
    %v139 = vadd.s32 %v131, %v81
    %vm140 = vcmp.lt.s32.totalorder %v132, 16
    %vm141 = vcmp.lt.s32.totalorder %v133, 16
    %vm142 = vcmp.lt.s32.totalorder %v134, 16
    %vm143 = vcmp.lt.s32.totalorder %v135, 16
    %vm144 = vcmp.lt.s32.totalorder %v136, 16
    %vm145 = vcmp.lt.s32.totalorder %v137, 16
    %vm146 = vcmp.lt.s32.totalorder %v138, 16
    %vm147 = vcmp.lt.s32.totalorder %v139, 16
    %v148 = vsel %vm140, %v122, 0.0
    %v149 = vsel %vm141, %v123, 0.0
    %v150 = vsel %vm142, %v124, 0.0
    %v151 = vsel %vm143, %v125, 0.0
    %v152 = vsel %vm144, %v126, 0.0
    %v153 = vsel %vm145, %v127, 0.0
    %v154 = vsel %vm146, %v128, 0.0
    %v155 = vsel %vm147, %v129, 0.0
    %v156 = vsel %vm140, %v90, 0.0
    %v157 = vsel %vm141, %v91, 0.0
    %v158 = vsel %vm142, %v92, 0.0
    %v159 = vsel %vm143, %v93, 0.0
    %v160 = vsel %vm144, %v94, 0.0
    %v161 = vsel %vm145, %v95, 0.0
    %v162 = vsel %vm146, %v96, 0.0
    %v163 = vsel %vm147, %v97, 0.0
    %v164 = vmul.f32 %v148, %v156
    %v165 = vmul.f32 %v149, %v157
    %v166 = vmul.f32 %v150, %v158
    %v167 = vmul.f32 %v151, %v159
    %v168 = vmul.f32 %v152, %v160
    %v169 = vmul.f32 %v153, %v161
    %v170 = vmul.f32 %v154, %v162
    %v171 = vmul.f32 %v155, %v163
    %v172 = vadd.f32 %v164, %v165
    %v173 = vadd.f32 %v172, %v166
    %v174 = vadd.f32 %v173, %v167
    %v175 = vadd.f32 %v174, %v168
    %v176 = vadd.f32 %v175, %v169
    %v177 = vadd.f32 %v176, %v170
    %v178 = vadd.f32 %v177, %v171
    %v179 = vadd.f32 %v178, 0.0
    %v180 = vadd.f32 %v148, %v149
    %v181 = vadd.f32 %v180, %v150
    %v182 = vadd.f32 %v181, %v151
    %v183 = vadd.f32 %v182, %v152
    %v184 = vadd.f32 %v183, %v153
    %v185 = vadd.f32 %v184, %v154
    %v186 = vadd.f32 %v185, %v155
    %v187 = vadd.f32 %v186, 0.0
    %v188 = vadd.f32 %v156, %v157
    %v189 = vadd.f32 %v188, %v158
    %v190 = vadd.f32 %v189, %v159
    %v191 = vadd.f32 %v190, %v160
    %v192 = vadd.f32 %v191, %v161
    %v193 = vadd.f32 %v192, %v162
    %v194 = vadd.f32 %v193, %v163
    %v195 = vadd.f32 %v194, 0.0
    %v196 = vld [vmem:[#allocation7] sm:$0xff]
    %v197 = vadd.f32 %v196, %v179
    %198 = vst [vmem:[#allocation7] sm:$0xff] %v197
    %v199 = vld [vmem:[#allocation7 + $0x8] sm:$0xff]
    %v200 = vadd.f32 %v199, %v187
    %201 = vst [vmem:[#allocation7 + $0x8] sm:$0xff] %v200
    %v202 = vld [vmem:[#allocation7 + $0x10] sm:$0xff]
    %v203 = vadd.f32 %v202, %v195
    %204 = vst [vmem:[#allocation7 + $0x10] sm:$0xff] %v203
    // Predicated region
    $region22: #{tpu_custom_call.1} parent=1 // pred_check
      _
    $region23: #{tpu_custom_call.1} parent=1 // pred_check_branch
      %206 = sbr.rel (0) target = $region25
    $region24: #{tpu_custom_call.1} parent=1 // pred_region
      %s208 = ssub.s32 384, 384
      %209 = vsyncadd [#allocation4], %s208
      %s210 = sshll.u32 [#allocation7], 4
      %s211 = int_to_ptr.vmem [resolvable:$true] %s210
      %216 = dma.vmem_to_hbm [thread:$0]  %s211, 384, %s2, [#allocation4], 128, 128, 8
    $region25: #{tpu_custom_call.1} parent=1 // pred_fallthru
      _
    // Predicated region
    $region26: #{tpu_custom_call.1} parent=1 // pred_check
      _
    $region27: #{tpu_custom_call.1} parent=1 // pred_check_branch
      %218 = sbr.rel (0) target = $region29
    $region28: #{tpu_custom_call.1} parent=1 // pred_region
      %219 = dma.done [#allocation4], 384
    $region29: #{tpu_custom_call.1} parent=1 // pred_fallthru
      _
    %220 = vsyncpa [#allocation3], 1
    %221 = vsyncpa [#allocation6], 1
    %222 = vsyncpa [#allocation4], 1

</llo_original>
